<compile_context>
chip_gen: v5e
topology: v5e:2x2
jax: 0.10.0
libtpu: 0.0.40
codegen_flags: <defaults>
</compile_context>

<pallas_src>
import functools

import jax
import jax.numpy as jnp
from jax.experimental import pallas as pl
from jax.experimental.pallas import tpu as pltpu


# ------------------------------------------------------------------ kernels

def _aspp_fused_kernel(xp_ref, w1_ref, w2_ref, w3_ref, w4_ref, wproj_ref,
                       x5_ref, bias_ref, o_ref,
                       acc1, acc2, acc3, acc4,
                       *, H, W, pad, dilations, co, cdt):
    """Fused ASPP head for one batch element, tiled over Cin (grid axis 1).

    xp_ref   : (1, H+2p, W+2p, tk)  padded input, Cin-tile k
    w1_ref   : (tk, Co)             1x1 branch weight (BN scale folded)
    w2..4_ref: (9, tk, Co)          3x3 atrous branch weights, tap-major
    wproj_ref: (5*Co, Co)           final 1x1 projection weight
    x5_ref   : (1, 1, Co)           global-pool branch output (already BN+ReLU)
    bias_ref : (5, Co) f32          BN biases: rows 0..3 branches, row 4 proj
    o_ref    : (1, H, W, Co)        final ASPP output
    acc1..4  : (H*W, Co) f32        per-branch pre-activation accumulators
    """
    k = pl.program_id(1)
    nk = pl.num_programs(1)

    @pl.when(k == 0)
    def _init():
        acc1[...] = jnp.zeros_like(acc1)
        acc2[...] = jnp.zeros_like(acc2)
        acc3[...] = jnp.zeros_like(acc3)
        acc4[...] = jnp.zeros_like(acc4)

    # 1x1 branch: center window of the padded tile.
    xc = xp_ref[0, pad:pad + H, pad:pad + W, :].reshape(H * W, -1)
    acc1[...] += jnp.dot(xc, w1_ref[...], preferred_element_type=jnp.float32)

    # 3x3 atrous branches: 9 statically shifted windows per branch.
    for acc, w_ref, d in ((acc2, w2_ref, dilations[0]),
                          (acc3, w3_ref, dilations[1]),
                          (acc4, w4_ref, dilations[2])):
        for t in range(9):
            i, j = t // 3, t % 3
            r0 = pad + (i - 1) * d
            c0 = pad + (j - 1) * d
            tap = xp_ref[0, r0:r0 + H, c0:c0 + W, :].reshape(H * W, -1)
            acc[...] += jnp.dot(tap, w_ref[t],
                                preferred_element_type=jnp.float32)

    @pl.when(k == nk - 1)
    def _finish():
        bias = bias_ref[...]                                   # (5, Co) f32
        # Per-branch BN bias + ReLU (scale already folded into the weights),
        # then accumulate the final 1x1 projection without the concat.
        proj = jnp.zeros((H * W, co), jnp.float32)
        for b, acc in enumerate((acc1, acc2, acc3, acc4)):
            br = jnp.maximum(acc[...] + bias[b:b + 1, :], 0.0).astype(cdt)
            proj += jnp.dot(br, wproj_ref[b * co:(b + 1) * co, :],
                            preferred_element_type=jnp.float32)
        # Global-pool branch: constant over pixels (bilinear upsample from 1x1
        # with align_corners=True == broadcast), so its projection is one row.
        gap = jnp.dot(x5_ref[0], wproj_ref[4 * co:5 * co, :],
                      preferred_element_type=jnp.float32)      # (1, Co)
        out = jnp.maximum(proj + gap + bias[4:5, :], 0.0)      # bn1 + ReLU
        o_ref[...] = out.reshape(1, H, W, co).astype(o_ref.dtype)


def _gap_conv_kernel(x_ref, w_ref, bias_ref, o_ref, acc, *, inv_hw, cdt):
    """Global average pool (tiled over H*W) + 1x1 conv + BN + ReLU."""
    s = pl.program_id(1)

    @pl.when(s == 0)
    def _init():
        acc[...] = jnp.zeros_like(acc)

    acc[...] += jnp.sum(x_ref[0].astype(jnp.float32), axis=0, keepdims=True)

    @pl.when(s == pl.num_programs(1) - 1)
    def _finish():
        mean = (acc[...] * inv_hw).astype(cdt)                  # (1, Cin)
        y = jnp.dot(mean, w_ref[...], preferred_element_type=jnp.float32)
        y = jnp.maximum(y + bias_ref[...], 0.0)
        o_ref[...] = y.reshape(1, 1, -1).astype(o_ref.dtype)


# ------------------------------------------------------------------ wrappers

def _aspp_fused(xp, x5, w1, w2, w3, w4, wproj, bias, *,
                H, W, pad, dilations, tk, out_dtype):
    N, Hp, Wp, Cin = xp.shape
    co = w1.shape[-1]
    assert Cin % tk == 0
    nk = Cin // tk
    kernel = functools.partial(_aspp_fused_kernel, H=H, W=W, pad=pad,
                               dilations=tuple(dilations), co=co,
                               cdt=xp.dtype)
    return pl.pallas_call(
        kernel,
        out_shape=jax.ShapeDtypeStruct((N, H, W, co), out_dtype),
        grid_spec=pltpu.PrefetchScalarGridSpec(
            num_scalar_prefetch=0,
            grid=(N, nk),                                   # K (Cin) axis last
            in_specs=[
                pl.BlockSpec((1, Hp, Wp, tk), lambda n, k: (n, 0, 0, k)),
                pl.BlockSpec((tk, co), lambda n, k: (k, 0)),
                pl.BlockSpec((9, tk, co), lambda n, k: (0, k, 0)),
                pl.BlockSpec((9, tk, co), lambda n, k: (0, k, 0)),
                pl.BlockSpec((9, tk, co), lambda n, k: (0, k, 0)),
                pl.BlockSpec((5 * co, co), lambda n, k: (0, 0)),
                pl.BlockSpec((1, 1, co), lambda n, k: (n, 0, 0)),
                pl.BlockSpec((5, co), lambda n, k: (0, 0)),
            ],
            out_specs=pl.BlockSpec((1, H, W, co), lambda n, k: (n, 0, 0, 0)),
            scratch_shapes=[pltpu.VMEM((H * W, co), jnp.float32)] * 4,
        ),
        compiler_params=pltpu.CompilerParams(
            dimension_semantics=("parallel", "arbitrary"),
            vmem_limit_bytes=48 * 1024 * 1024),
    )(xp, w1, w2, w3, w4, wproj, x5, bias)


def _gap_branch(x_flat, w_pool, bias_pool, *, thw, out_dtype):
    N, HW, Cin = x_flat.shape
    co = w_pool.shape[-1]
    assert HW % thw == 0
    ns = HW // thw
    kernel = functools.partial(_gap_conv_kernel, inv_hw=1.0 / HW,
                               cdt=x_flat.dtype)
    return pl.pallas_call(
        kernel,
        out_shape=jax.ShapeDtypeStruct((N, 1, co), out_dtype),
        grid_spec=pltpu.PrefetchScalarGridSpec(
            num_scalar_prefetch=0,
            grid=(N, ns),
            in_specs=[
                pl.BlockSpec((1, thw, Cin), lambda n, s: (n, s, 0)),
                pl.BlockSpec((Cin, co), lambda n, s: (0, 0)),
                pl.BlockSpec((1, co), lambda n, s: (0, 0)),
            ],
            out_specs=pl.BlockSpec((1, 1, co), lambda n, s: (n, 0, 0)),
            scratch_shapes=[pltpu.VMEM((1, Cin), jnp.float32)],
        ),
        compiler_params=pltpu.CompilerParams(
            dimension_semantics=("parallel", "arbitrary")),
    )(x_flat, w_pool, bias_pool)


# ------------------------------------------------------------------ params

def kaiming_normal(key, kh, kw, cin, cout):
    # torch.nn.init.kaiming_normal_ default: gain=sqrt(2), fan_in = kh*kw*cin
    fan_in = kh * kw * cin
    std = (2.0 / fan_in) ** 0.5
    return std * jax.random.normal(key, (kh, kw, cin, cout), dtype=jnp.float32)


def bn_scale_bias(c, eps=1e-5):
    # Fresh BatchNorm2d inference stats: gamma=1, beta=0, mean=0, var=1.
    scale = jnp.full((c,), 1.0 / jnp.sqrt(1.0 + eps), dtype=jnp.float32)
    bias = jnp.zeros((c,), dtype=jnp.float32)
    return scale, bias


def init_aspp_params(key, inplanes, planes, dilations=(1, 6, 12, 18),
                     compute_dtype=jnp.bfloat16):
    keys = jax.random.split(key, 6)
    p = {"dilations": tuple(dilations), "planes": planes,
         "compute_dtype": compute_dtype}

    def fold(w, scale):   # fold BN scale into the conv output channels, cast
        return (w * scale).astype(compute_dtype)

    s1, b1 = bn_scale_bias(planes)
    s2, b2 = bn_scale_bias(planes)
    s3, b3 = bn_scale_bias(planes)
    s4, b4 = bn_scale_bias(planes)
    sp, bp = bn_scale_bias(planes)
    sj, bj = bn_scale_bias(planes)

    p["w1"] = fold(kaiming_normal(keys[0], 1, 1, inplanes, planes)
                   .reshape(inplanes, planes), s1)
    p["w2"] = fold(kaiming_normal(keys[1], 3, 3, inplanes, planes)
                   .reshape(9, inplanes, planes), s2)
    p["w3"] = fold(kaiming_normal(keys[2], 3, 3, inplanes, planes)
                   .reshape(9, inplanes, planes), s3)
    p["w4"] = fold(kaiming_normal(keys[3], 3, 3, inplanes, planes)
                   .reshape(9, inplanes, planes), s4)
    p["w_pool"] = fold(kaiming_normal(keys[4], 1, 1, inplanes, planes)
                       .reshape(inplanes, planes), sp)
    p["w_proj"] = fold(kaiming_normal(keys[5], 1, 1, 5 * planes, planes)
                       .reshape(5 * planes, planes), sj)

    p["bias_main"] = jnp.stack([b1, b2, b3, b4, bj], axis=0)   # (5, Co) f32
    p["bias_pool"] = bp.reshape(1, planes)                     # (1, Co) f32
    return p


# ------------------------------------------------------------------ forward

def aspp_forward(params, x_nchw):
    N, Cin, H, W = x_nchw.shape
    cdt = params["compute_dtype"]
    dil = params["dilations"]
    co = params["planes"]
    pad = max(dil[1:])

    # NCHW -> NHWC once (channels on the 128-lane axis), bf16 compute dtype.
    x = jnp.transpose(x_nchw, (0, 2, 3, 1)).astype(cdt)
    # One spatial zero-pad by max dilation serves all three atrous branches.
    xp = jnp.pad(x, ((0, 0), (pad, pad), (pad, pad), (0, 0)))

    # Cin (reduction) tile: largest of 256/128 that divides Cin, else full.
    tk = Cin
    for cand in (256, 128):
        if Cin % cand == 0:
            tk = cand
            break
    # Spatial tile for the pooling reduction.
    thw = H * W
    for cand in (128, 256, 512):
        if (H * W) % cand == 0:
            thw = cand
            break
    # TODO(synk): ragged Cin / H*W tiles (e.g. 65x65 feature maps) fall back to
    # a single full-size block; add cdiv + masking for production shapes.

    # Global-average-pool branch (pool + 1x1 conv + BN + ReLU), -> (N, 1, Co).
    x5 = _gap_branch(x.reshape(N, H * W, Cin), params["w_pool"],
                     params["bias_pool"], thw=thw, out_dtype=cdt)

    # Fused: 4 conv branches + BN + ReLU + concat-free 1x1 projection + BN+ReLU.
    out = _aspp_fused(xp, x5, params["w1"], params["w2"], params["w3"],
                      params["w4"], params["w_proj"], params["bias_main"],
                      H=H, W=W, pad=pad, dilations=dil[1:], tk=tk,
                      out_dtype=jnp.float32)                    # (N, H, W, Co)

    # TODO(synk): nn.Dropout(0.5) treated as eval-mode identity.
    return jnp.transpose(out, (0, 3, 1, 2))                     # -> NCHW


# ------------------------------------------------------------------ main

if __name__ == "__main__":
    key = jax.random.PRNGKey(0)
    k_x, k_p = jax.random.split(key)

    # Small stand-in for (inplanes=2048, planes=256, output_stride=16).
    # Cin=512 / tk=256 and H*W=256 / thw=128 exercise both reduction grid axes.
    N, Cin, H, W = 2, 512, 16, 16
    planes = 128
    dilations = (1, 6, 12, 18)

    x = jax.random.normal(k_x, (N, Cin, H, W), dtype=jnp.float32)
    params = init_aspp_params(k_p, Cin, planes, dilations)

    out = jax.block_until_ready(aspp_forward(params, x))
    assert out.shape == (N, planes, H, W), out.shape
    assert bool(jnp.all(jnp.isfinite(out)))
    print("KERNEL_OK")
</pallas_src>

<mosaic_0001>
module attributes {stable_mosaic.version = 11 : i64} {
  func.func @_gap_conv_kernel(%arg0: i32, %arg1: i32, %arg2: memref<1x128x512xbf16, #tpu.memory_space<vmem>>, %arg3: memref<512x128xbf16, #tpu.memory_space<vmem>>, %arg4: memref<1x128xf32, #tpu.memory_space<vmem>>, %arg5: memref<1x1x128xbf16, #tpu.memory_space<vmem>>, %arg6: memref<1x512xf32, #tpu.memory_space<vmem>>) attributes {dimension_semantics = [#tpu.dimension_semantics<parallel>, #tpu.dimension_semantics<arbitrary>], iteration_bounds = array<i64: 2, 2>, scalar_prefetch = 0 : i64, scratch_operands = 1 : i64, tpu.core_type = #tpu.core_type<tc>, window_params = [{transform_indices = @transform_0, window_bounds = array<i64: 1, 128, 512>}, {pipeline_mode = #tpu.pipeline_mode<synchronous>, transform_indices = @transform_1, window_bounds = array<i64: 512, 128>}, {pipeline_mode = #tpu.pipeline_mode<synchronous>, transform_indices = @transform_2, window_bounds = array<i64: 1, 128>}, {transform_indices = @transform_3, window_bounds = array<i64: 1, 1, 128>}]} {
    %c0_i32 = arith.constant 0 : i32
    %0 = arith.cmpi eq, %arg1, %c0_i32 : i32
    %1 = arith.extui %0 : i1 to i32
    %c0_i32_0 = arith.constant 0 : i32
    %2 = arith.cmpi ne, %1, %c0_i32_0 : i32
    scf.if %2 {
      %cst_8 = arith.constant 0.000000e+00 : f32
      %14 = vector.broadcast %cst_8 : f32 to vector<1x512xf32>
      %c0_9 = arith.constant 0 : index
      %c0_10 = arith.constant 0 : index
      %15 = vector.load %arg6[%c0_9, %c0_10] : memref<1x512xf32, #tpu.memory_space<vmem>>, vector<1x512xf32>
      tpu.vector_store %arg6[%c0_9, %c0_10], %14 {strides = array<i32>} : memref<1x512xf32, #tpu.memory_space<vmem>>, vector<1x512xf32>,
    } else {
    }
    %c0 = arith.constant 0 : index
    %c0_1 = arith.constant 0 : index
    %3 = vector.load %arg6[%c0, %c0_1] : memref<1x512xf32, #tpu.memory_space<vmem>>, vector<1x512xf32>
    %c0_2 = arith.constant 0 : index
    %c0_3 = arith.constant 0 : index
    %c0_4 = arith.constant 0 : index
    %4 = vector.load %arg2[%c0_2, %c0_3, %c0_4] : memref<1x128x512xbf16, #tpu.memory_space<vmem>>, vector<1x128x512xbf16>
    %5 = vector.shape_cast %4 : vector<1x128x512xbf16> to vector<128x512xbf16>
    %6 = arith.extf %5 : vector<128x512xbf16> to vector<128x512xf32>
    %cst = arith.constant dense<0.000000e+00> : vector<512xf32>
    %7 = vector.multi_reduction <add>, %6, %cst [0] : vector<128x512xf32> to vector<512xf32>
    %8 = vector.shape_cast %7 : vector<512xf32> to vector<1x512xf32>
    %9 = arith.addf %3, %8 : vector<1x512xf32>
    %c0_5 = arith.constant 0 : index
    %c0_6 = arith.constant 0 : index
    %10 = vector.load %arg6[%c0_5, %c0_6] : memref<1x512xf32, #tpu.memory_space<vmem>>, vector<1x512xf32>
    tpu.vector_store %arg6[%c0_5, %c0_6], %9 {strides = array<i32>} : memref<1x512xf32, #tpu.memory_space<vmem>>, vector<1x512xf32>,
    %c1_i32 = arith.constant 1 : i32
    %11 = arith.cmpi eq, %arg1, %c1_i32 : i32
    %12 = arith.extui %11 : i1 to i32
    %c0_i32_7 = arith.constant 0 : i32
    %13 = arith.cmpi ne, %12, %c0_i32_7 : i32
    scf.if %13 {
      %c0_8 = arith.constant 0 : index
      %c0_9 = arith.constant 0 : index
      %14 = vector.load %arg6[%c0_8, %c0_9] : memref<1x512xf32, #tpu.memory_space<vmem>>, vector<1x512xf32>
      %cst_10 = arith.constant 3.906250e-03 : f32
      %15 = vector.broadcast %cst_10 : f32 to vector<1x512xf32>
      %16 = arith.mulf %14, %15 : vector<1x512xf32>
      %17 = arith.truncf %16 : vector<1x512xf32> to vector<1x512xbf16>
      %c0_11 = arith.constant 0 : index
      %c0_12 = arith.constant 0 : index
      %18 = vector.load %arg3[%c0_11, %c0_12] : memref<512x128xbf16, #tpu.memory_space<vmem>>, vector<512x128xbf16>
      %cst_13 = arith.constant dense<0.000000e+00> : vector<1x128xf32>
      %19 = tpu.matmul %17, %18, %cst_13 {dimension_numbers = #tpu.dot_dimension_numbers<[1], [0], [0], [1], [0, 0, 1, 1], [], []>} : vector<1x512xbf16>, vector<512x128xbf16>, vector<1x128xf32> -> vector<1x128xf32>
      %c0_14 = arith.constant 0 : index
      %c0_15 = arith.constant 0 : index
      %20 = vector.load %arg4[%c0_14, %c0_15] : memref<1x128xf32, #tpu.memory_space<vmem>>, vector<1x128xf32>
      %21 = arith.addf %19, %20 : vector<1x128xf32>
      %cst_16 = arith.constant 0.000000e+00 : f32
      %22 = vector.broadcast %cst_16 : f32 to vector<1x128xf32>
      %23 = arith.maximumf %21, %22 : vector<1x128xf32>
      %24 = vector.shape_cast %23 : vector<1x128xf32> to vector<1x1x128xf32>
      %25 = arith.truncf %24 : vector<1x1x128xf32> to vector<1x1x128xbf16>
      %c0_17 = arith.constant 0 : index
      %c0_18 = arith.constant 0 : index
      %c0_19 = arith.constant 0 : index
      %26 = vector.load %arg5[%c0_17, %c0_18, %c0_19] : memref<1x1x128xbf16, #tpu.memory_space<vmem>>, vector<1x1x128xbf16>
      tpu.vector_store %arg5[%c0_17, %c0_18, %c0_19], %25 {strides = array<i32>} : memref<1x1x128xbf16, #tpu.memory_space<vmem>>, vector<1x1x128xbf16>,
    } else {
    }
    return
  }
  func.func @transform_0(%arg0: i32, %arg1: i32) -> (i32, i32, i32) {
    %c0_i32 = arith.constant 0 : i32
    %c0_i32_0 = arith.constant 0 : i32
    return %arg0, %arg1, %c0_i32 : i32, i32, i32
  }
  func.func @transform_1(%arg0: i32, %arg1: i32) -> (i32, i32) {
    %c0_i32 = arith.constant 0 : i32
    %c0_i32_0 = arith.constant 0 : i32
    %c0_i32_1 = arith.constant 0 : i32
    return %c0_i32, %c0_i32_0 : i32, i32
  }
  func.func @transform_2(%arg0: i32, %arg1: i32) -> (i32, i32) {
    %c0_i32 = arith.constant 0 : i32
    %c0_i32_0 = arith.constant 0 : i32
    %c0_i32_1 = arith.constant 0 : i32
    return %c0_i32, %c0_i32_0 : i32, i32
  }
  func.func @transform_3(%arg0: i32, %arg1: i32) -> (i32, i32, i32) {
    %c0_i32 = arith.constant 0 : i32
    %c0_i32_0 = arith.constant 0 : i32
    %c0_i32_1 = arith.constant 0 : i32
    return %arg0, %c0_i32, %c0_i32_0 : i32, i32, i32
  }
}

</mosaic_0001>

<llo_original>
// kernel: tpu_custom_call.1
$region0: #{tpu_custom_call.1}
  #allocation0 [shape = 'u32[]', space=smem, size = 0x4, offset = 0x4, fixed_abs, tag = 'smem constant byte address 0x4 - core index']
  #allocation1 [shape = 'u32[72,128]{1,0:T(1,128)}', space=vmem, size = 0x9000, scoped, tag = 'internal scratch']
  #allocation2 [shape = 'f32[1,512]{1,0:T(1,128)}', space=vmem, size = 0x800, scoped, tag = 'scratch operand']
  %s0 = inlined_call_operand.hbm [shape: bf16[2,256,512], index: 0, kind: input, shape index: {}]
  %s1 = inlined_call_operand.hbm [shape: bf16[512,128], index: 1, kind: input, shape index: {}]
  %s2 = inlined_call_operand.vmem [shape: f32[1,128], index: 2, kind: input, shape index: {}]
  %s3 = inlined_call_operand.vmem [shape: bf16[2,1,128], index: 3, kind: output, shape index: {}]
  %s4 = sld [smem:[#allocation0]]
  $region61: #{tpu_custom_call.1} parent=0
    _
  %s6 = ssub.s32 1, %s4
  %s7 = scalar_select 0, %s6, %s4
  $region1: #{tpu_custom_call.1} parent=0
    #allocation3 [shape = 'u8[262144]{0}', space=vmem, size = 0x40000, scoped, tag = 'input window, operand 0']
    #allocation4 [shape = 's32[2]{0}', space=sflag, size = 0x8, scoped, tag = 'scoped memory for tpu_custom_call.1']
    #allocation5 [shape = 'u8[131072]{0}', space=vmem, size = 0x20000, scoped, tag = 'input window, operand 1, single buffered']
    #allocation6 [shape = 's32[1]{0}', space=sflag, size = 0x4, scoped, tag = 'scoped memory for tpu_custom_call.1']
    %8 = vsyncpa [#allocation4], 0
    %s9 = scalar_lea.sflag [#allocation4], 1
    %10 = vsyncpa %s9, 0
    %11 = vsyncpa [#allocation6], 0
    loop: start=0, step=1, limit=6
    $region2: #{tpu_custom_call.1} parent=1 // loop_pre_header
      _
    $region3: #{tpu_custom_call.1} parent=1 // loop_header
      %s13 = sphi 0, %s17
      %p14 = scmp.ge.s32.totalorder %s13, 6
      %s20 = sphi 0, %s32
      %s21 = sphi 0, %s28
      %s22 = sphi 0, %s20
      %s23 = sphi 0, %s21
      %s24 = sphi 0, %s22
      %s25 = sphi 0, %s23
      %s37 = sphi 0, %s39
      %s40 = sphi 0, %s37
      %s41 = sphi 0, %s40
      %s57 = sphi 0, %s41
      %s61 = sphi 0, %s61
      %s63 = sphi 0, %s61
      %s64 = sphi 0, %s63
      %s78 = sphi 0, %s64
      %s82 = sphi 0, %s82
      %s84 = sphi 0, %s82
      %s85 = sphi 0, %s84
      %s99 = sphi 0, %s85
      %s105 = sphi 0, %s107
      %s108 = sphi 0, %s105
      %s109 = sphi 0, %s108
      %s125 = sphi 0, %s109
    $region4: #{tpu_custom_call.1} parent=1 // loop_header_branch
      %16 = sbr.rel (%p14) target = $region8
    $region5: #{tpu_custom_call.1} parent=1 // loop_body
      %s18 = ssub.s32 %s13, 1
      %s19 = ssub.s32 %s13, 2
      %s26 = sadd.s32 1, %s21
      %p27 = scmp.ge.s32.totalorder %s26, 2
      %s28 = scalar_select %p27, 0, %s26
      %s29 = sadd.s32 1, %s20
      %s30 = scalar_select %p27, %s29, %s20
      %p31 = scmp.ge.s32.totalorder %s30, 2
      %s32 = scalar_select %p31, 0, %s30
      %s33 = ssub.s32 %s20, %s32
      %s34 = ssub.s32 %s21, %s28
      %s35 = sor.u32 %s33, %s34
      %p36 = scmp.eq.s32.totalorder %s35, 0
      %s38 = sadd.s32 %s37, 1
      %s39 = scalar_select %p36, %s37, %s38
      %p42 = pneg %p36
      %p43 = scmp.eq.s32.totalorder %s13, 3
      %p44 = por %p42, %p43
      %p45 = scmp.ne.s32.totalorder %s37, %s40
      %p46 = scmp.eq.s32.totalorder %s13, 0
      %p47 = por %p45, %p46
      %p48 = scmp.ne.s32.totalorder %s37, %s40
      %p49 = scmp.eq.s32.totalorder %s18, 3
      %p50 = por %p48, %p49
      %p51 = scmp.ne.s32.totalorder %s40, %s41
      %p52 = scmp.eq.s32.totalorder %s18, 0
      %p53 = por %p51, %p52
      %p54 = scmp.ne.s32.totalorder %s40, %s41
      %p55 = scmp.eq.s32.totalorder %s19, 3
      %p56 = por %p54, %p55
      %p58 = scmp.ne.s32.totalorder %s41, %s57
      %p59 = scmp.eq.s32.totalorder %s19, 0
      %p60 = por %p58, %p59
      %s62 = sadd.s32 %s61, 1
      %p65 = scmp.eq.s32.totalorder %s13, 3
      %p66 = scmp.ne.s32.totalorder %s61, %s63
      %p67 = scmp.eq.s32.totalorder %s13, 0
      %p68 = por %p66, %p67
      %p69 = scmp.ne.s32.totalorder %s61, %s63
      %p70 = scmp.eq.s32.totalorder %s18, 3
      %p71 = por %p69, %p70
      %p72 = scmp.ne.s32.totalorder %s63, %s64
      %p73 = scmp.eq.s32.totalorder %s18, 0
      %p74 = por %p72, %p73
      %p75 = scmp.ne.s32.totalorder %s63, %s64
      %p76 = scmp.eq.s32.totalorder %s19, 3
      %p77 = por %p75, %p76
      %p79 = scmp.ne.s32.totalorder %s64, %s78
      %p80 = scmp.eq.s32.totalorder %s19, 0
      %p81 = por %p79, %p80
      %s83 = sadd.s32 %s82, 1
      %p86 = scmp.eq.s32.totalorder %s13, 3
      %p87 = scmp.ne.s32.totalorder %s82, %s84
      %p88 = scmp.eq.s32.totalorder %s13, 0
      %p89 = por %p87, %p88
      %p90 = scmp.ne.s32.totalorder %s82, %s84
      %p91 = scmp.eq.s32.totalorder %s18, 3
      %p92 = por %p90, %p91
      %p93 = scmp.ne.s32.totalorder %s84, %s85
      %p94 = scmp.eq.s32.totalorder %s18, 0
      %p95 = por %p93, %p94
      %p96 = scmp.ne.s32.totalorder %s84, %s85
      %p97 = scmp.eq.s32.totalorder %s19, 3
      %p98 = por %p96, %p97
      %p100 = scmp.ne.s32.totalorder %s85, %s99
      %p101 = scmp.eq.s32.totalorder %s19, 0
      %p102 = por %p100, %p101
      %s103 = ssub.s32 %s20, %s32
      %p104 = scmp.eq.s32.totalorder %s103, 0
      %s106 = sadd.s32 %s105, 1
      %s107 = scalar_select %p104, %s105, %s106
      %p110 = pneg %p104
      %p111 = scmp.eq.s32.totalorder %s13, 3
      %p112 = por %p110, %p111
      %p113 = scmp.ne.s32.totalorder %s105, %s108
      %p114 = scmp.eq.s32.totalorder %s13, 0
      %p115 = por %p113, %p114
      %p116 = scmp.ne.s32.totalorder %s105, %s108
      %p117 = scmp.eq.s32.totalorder %s18, 3
      %p118 = por %p116, %p117
      %p119 = scmp.ne.s32.totalorder %s108, %s109
      %p120 = scmp.eq.s32.totalorder %s18, 0
      %p121 = por %p119, %p120
      %p122 = scmp.ne.s32.totalorder %s108, %s109
      %p123 = scmp.eq.s32.totalorder %s19, 3
      %p124 = por %p122, %p123
      %p126 = scmp.ne.s32.totalorder %s109, %s125
      %p127 = scmp.eq.s32.totalorder %s19, 0
      %p128 = por %p126, %p127
      %p129 = scmp.le.s32.totalorder 1, %s13
      %p130 = scmp.lt.s32.totalorder %s13, 5
      %p131 = pnand %p129, %p130
      %p132 = pneg %p131
      // Predicated region
      $region9: #{tpu_custom_call.1} parent=5 // pred_check
        _
      $region10: #{tpu_custom_call.1} parent=5 // pred_check_branch
        %134 = sbr.rel (%p131) target = $region12
      $region11: #{tpu_custom_call.1} parent=5 // pred_region
        %s135 = ssub.s32 %s13, 1
        // Predicated region
        $region13: #{tpu_custom_call.1} parent=11 // pred_check
          %p136 = pneg %p74
        $region14: #{tpu_custom_call.1} parent=11 // pred_check_branch
          %138 = sbr.rel (%p136) target = $region16
        $region15: #{tpu_custom_call.1} parent=11 // pred_region
          %140 = vsyncadd [#allocation6], 0
          %s141 = sshll.u32 %s1, 4
          %s142 = int_to_ptr.hbm [resolvable:$true] %s141
          %s143 = sshll.u32 [#allocation5], 4
          %s144 = int_to_ptr.vmem [resolvable:$true] %s143
          %149 = dma.hbm_to_vmem [thread:$0]  %s142, 4096, %s144, [#allocation6], 64, 64, 4
        $region16: #{tpu_custom_call.1} parent=11 // pred_fallthru
          _
        // Predicated region
        $region17: #{tpu_custom_call.1} parent=11 // pred_check
          %p150 = pneg %p95
        $region18: #{tpu_custom_call.1} parent=11 // pred_check_branch
          %152 = sbr.rel (%p150) target = $region20
        $region19: #{tpu_custom_call.1} parent=11 // pred_region
          _
        $region20: #{tpu_custom_call.1} parent=11 // pred_fallthru
          _
      $region12: #{tpu_custom_call.1} parent=5 // pred_fallthru
        _
      %p153 = scmp.lt.s32.totalorder %s13, 4
      // Predicated region
      $region21: #{tpu_custom_call.1} parent=5 // pred_check
        %p154 = pneg %p153
      $region22: #{tpu_custom_call.1} parent=5 // pred_check_branch
        %156 = sbr.rel (%p154) target = $region24
      $region23: #{tpu_custom_call.1} parent=5 // pred_region
        // Predicated region
        $region25: #{tpu_custom_call.1} parent=23 // pred_check
          %p157 = pneg %p47
        $region26: #{tpu_custom_call.1} parent=23 // pred_check_branch
          %159 = sbr.rel (%p157) target = $region28
        $region27: #{tpu_custom_call.1} parent=23 // pred_region
          %s160 = sand.u32 %s37, 1
          %s161 = scalar_lea.sflag [#allocation4], %s160
          %s162 = sand.u32 %s37, 1
          %s163 = smul.addr %s162, 256
          %s164 = scalar_lea.vmem [#allocation3], %s163
          %s165 = smul.u32 16, %s21
          %167 = vsyncadd %s161, 0
          %s168 = smul.addr %s165, 4
          %s169 = smul.addr %s20, 128
          %s170 = sadd.s32 %s168, %s169
          %s171 = smul.addr %s170, 4
          %s172 = scalar_lea.hbm %s0, %s171
          %s173 = sshll.u32 %s172, 4
          %s174 = int_to_ptr.hbm [resolvable:$true] %s173
          %s175 = sshll.u32 %s164, 4
          %s176 = int_to_ptr.vmem [resolvable:$true] %s175
          %181 = dma.hbm_to_vmem [thread:$0]  %s174, 4096, %s176, %s161, 256, 256, 16
        $region28: #{tpu_custom_call.1} parent=23 // pred_fallthru
          _
      $region24: #{tpu_custom_call.1} parent=5 // pred_fallthru
        _
      %p182 = scmp.le.s32.totalorder 1, %s13
      %p183 = scmp.lt.s32.totalorder %s13, 5
      %p184 = pnand %p182, %p183
      %p185 = pneg %p184
      // Predicated region
      $region29: #{tpu_custom_call.1} parent=5 // pred_check
        _
      $region30: #{tpu_custom_call.1} parent=5 // pred_check_branch
        %187 = sbr.rel (%p184) target = $region32
      $region31: #{tpu_custom_call.1} parent=5 // pred_region
        %s188 = ssub.s32 %s13, 1
        %s189 = sand.u32 %s40, 1
        %s190 = scalar_lea.sflag [#allocation4], %s189
        %s191 = sand.u32 %s40, 1
        %s192 = smul.addr %s191, 256
        %s193 = scalar_lea.vmem [#allocation3], %s192
        // Predicated region
        $region33: #{tpu_custom_call.1} parent=31 // pred_check
          %p194 = pneg %p53
        $region34: #{tpu_custom_call.1} parent=31 // pred_check_branch
          %196 = sbr.rel (%p194) target = $region36
        $region35: #{tpu_custom_call.1} parent=31 // pred_region
          %198 = dma.done %s190, 4096
        $region36: #{tpu_custom_call.1} parent=31 // pred_fallthru
          _
        // Predicated region
        $region37: #{tpu_custom_call.1} parent=31 // pred_check
          %p199 = pneg %p74
        $region38: #{tpu_custom_call.1} parent=31 // pred_check_branch
          %201 = sbr.rel (%p199) target = $region40
        $region39: #{tpu_custom_call.1} parent=31 // pred_region
          %203 = dma.done [#allocation6], 4096
        $region40: #{tpu_custom_call.1} parent=31 // pred_fallthru
          _
        %s204 = sand.u32 %s40, 1
        %s205 = scalar_lea.sflag [#allocation4], %s204
        %s206 = sand.u32 %s40, 1
        %s207 = smul.addr %s206, 256
        %s208 = scalar_lea.vmem [#allocation3], %s207
        %p209 = pneg %p53
        %p210 = pneg %p50
        %p211 = pneg %p74
        %p212 = pneg %p71
        %p213 = pneg %p95
        %p214 = pneg %p92
        %p215 = pneg %p121
        %p216 = pneg %p118
        %p217 = scmp.lt.s32.totalorder %s22, 1
        %s218 = scalar_select %p217, %s22, 1
        %s219 = scalar_lea.vmem %s3, %s218
        %s220 = smul.u32 16, %s23
        %p221 = scmp.lt.s32.totalorder %s22, 1
        %s222 = scalar_select %p221, %s22, 1
        %s223 = scalar_lea.vmem %s3, %s222
        %p224 = scmp.eq.s32.totalorder %s23, 0
        // Predicated region
        $region41: #{tpu_custom_call.1} parent=31 // pred_check
          %p225 = pneg %p224
        $region42: #{tpu_custom_call.1} parent=31 // pred_check_branch
          %227 = sbr.rel (%p225) target = $region44
        $region43: #{tpu_custom_call.1} parent=31 // pred_region
          %v228 = vlaneseq
          %vm229 = vcmp.ge.s32.totalorder %v228, 0
          %vm230 = vcmp.lt.s32.totalorder %v228, 512
          %vm231 = vmand %vm229, %vm230
          %232 = vst.msk [vmem:[#allocation2] sm:$0xf] %vm231, 0.0
        $region44: #{tpu_custom_call.1} parent=31 // pred_fallthru
          _
        %v233 = vld [vmem:[#allocation2] sm:$0xf]
        %v234 = vld [vmem:[%s193] sm:$0xff]
        %v235 = vld [vmem:[%s193 + $0x8] sm:$0xff]
        %v236 = vld [vmem:[%s193 + $0x10] sm:$0xff]
        %v237 = vld [vmem:[%s193 + $0x18] sm:$0xff]
        %v238 = vld [vmem:[%s193 + $0x20] sm:$0xff]
        %v239 = vld [vmem:[%s193 + $0x28] sm:$0xff]
        %v240 = vld [vmem:[%s193 + $0x30] sm:$0xff]
        %v241 = vld [vmem:[%s193 + $0x38] sm:$0xff]
        %v242 = vld [vmem:[%s193 + $0x40] sm:$0xff]
        %v243 = vld [vmem:[%s193 + $0x48] sm:$0xff]
        %v244 = vld [vmem:[%s193 + $0x50] sm:$0xff]
        %v245 = vld [vmem:[%s193 + $0x58] sm:$0xff]
        %v246 = vld [vmem:[%s193 + $0x60] sm:$0xff]
        %v247 = vld [vmem:[%s193 + $0x68] sm:$0xff]
        %v248 = vld [vmem:[%s193 + $0x70] sm:$0xff]
        %v249 = vld [vmem:[%s193 + $0x78] sm:$0xff]
        %v250 = vld [vmem:[%s193 + $0x80] sm:$0xff]
        %v251 = vld [vmem:[%s193 + $0x88] sm:$0xff]
        %v252 = vld [vmem:[%s193 + $0x90] sm:$0xff]
        %v253 = vld [vmem:[%s193 + $0x98] sm:$0xff]
        %v254 = vld [vmem:[%s193 + $0xa0] sm:$0xff]
        %v255 = vld [vmem:[%s193 + $0xa8] sm:$0xff]
        %v256 = vld [vmem:[%s193 + $0xb0] sm:$0xff]
        %v257 = vld [vmem:[%s193 + $0xb8] sm:$0xff]
        %v258 = vld [vmem:[%s193 + $0xc0] sm:$0xff]
        %v259 = vld [vmem:[%s193 + $0xc8] sm:$0xff]
        %v260 = vld [vmem:[%s193 + $0xd0] sm:$0xff]
        %v261 = vld [vmem:[%s193 + $0xd8] sm:$0xff]
        %v262 = vld [vmem:[%s193 + $0xe0] sm:$0xff]
        %v263 = vld [vmem:[%s193 + $0xe8] sm:$0xff]
        %v264 = vld [vmem:[%s193 + $0xf0] sm:$0xff]
        %v265 = vld [vmem:[%s193 + $0xf8] sm:$0xff]
        %v266 = vunpack.c.l.bf16 %v234
        %v267 = vunpack.c.h.bf16 %v234
        %v268 = vunpack.c.l.bf16 %v235
        %v269 = vunpack.c.h.bf16 %v235
        %v270 = vunpack.c.l.bf16 %v236
        %v271 = vunpack.c.h.bf16 %v236
        %v272 = vunpack.c.l.bf16 %v237
        %v273 = vunpack.c.h.bf16 %v237
        %v274 = vunpack.c.l.bf16 %v238
        %v275 = vunpack.c.h.bf16 %v238
        %v276 = vunpack.c.l.bf16 %v239
        %v277 = vunpack.c.h.bf16 %v239
        %v278 = vunpack.c.l.bf16 %v240
        %v279 = vunpack.c.h.bf16 %v240
        %v280 = vunpack.c.l.bf16 %v241
        %v281 = vunpack.c.h.bf16 %v241
        %v282 = vunpack.c.l.bf16 %v242
        %v283 = vunpack.c.h.bf16 %v242
        %v284 = vunpack.c.l.bf16 %v243
        %v285 = vunpack.c.h.bf16 %v243
        %v286 = vunpack.c.l.bf16 %v244
        %v287 = vunpack.c.h.bf16 %v244
        %v288 = vunpack.c.l.bf16 %v245
        %v289 = vunpack.c.h.bf16 %v245
        %v290 = vunpack.c.l.bf16 %v246
        %v291 = vunpack.c.h.bf16 %v246
        %v292 = vunpack.c.l.bf16 %v247
        %v293 = vunpack.c.h.bf16 %v247
        %v294 = vunpack.c.l.bf16 %v248
        %v295 = vunpack.c.h.bf16 %v248
        %v296 = vunpack.c.l.bf16 %v249
        %v297 = vunpack.c.h.bf16 %v249
        %v298 = vunpack.c.l.bf16 %v250
        %v299 = vunpack.c.h.bf16 %v250
        %v300 = vunpack.c.l.bf16 %v251
        %v301 = vunpack.c.h.bf16 %v251
        %v302 = vunpack.c.l.bf16 %v252
        %v303 = vunpack.c.h.bf16 %v252
        %v304 = vunpack.c.l.bf16 %v253
        %v305 = vunpack.c.h.bf16 %v253
        %v306 = vunpack.c.l.bf16 %v254
        %v307 = vunpack.c.h.bf16 %v254
        %v308 = vunpack.c.l.bf16 %v255
        %v309 = vunpack.c.h.bf16 %v255
        %v310 = vunpack.c.l.bf16 %v256
        %v311 = vunpack.c.h.bf16 %v256
        %v312 = vunpack.c.l.bf16 %v257
        %v313 = vunpack.c.h.bf16 %v257
        %v314 = vunpack.c.l.bf16 %v258
        %v315 = vunpack.c.h.bf16 %v258
        %v316 = vunpack.c.l.bf16 %v259
        %v317 = vunpack.c.h.bf16 %v259
        %v318 = vunpack.c.l.bf16 %v260
        %v319 = vunpack.c.h.bf16 %v260
        %v320 = vunpack.c.l.bf16 %v261
        %v321 = vunpack.c.h.bf16 %v261
        %v322 = vunpack.c.l.bf16 %v262
        %v323 = vunpack.c.h.bf16 %v262
        %v324 = vunpack.c.l.bf16 %v263
        %v325 = vunpack.c.h.bf16 %v263
        %v326 = vunpack.c.l.bf16 %v264
        %v327 = vunpack.c.h.bf16 %v264
        %v328 = vunpack.c.l.bf16 %v265
        %v329 = vunpack.c.h.bf16 %v265
        %v330 = vadd.f32 %v266, %v270
        %v331 = vadd.f32 %v330, %v274
        %v332 = vadd.f32 %v331, %v278
        %v333 = vadd.f32 %v332, %v282
        %v334 = vadd.f32 %v333, %v286
        %v335 = vadd.f32 %v334, %v290
        %v336 = vadd.f32 %v335, %v294
        %v337 = vadd.f32 %v336, %v298
        %v338 = vadd.f32 %v337, %v302
        %v339 = vadd.f32 %v338, %v306
        %v340 = vadd.f32 %v339, %v310
        %v341 = vadd.f32 %v340, %v314
        %v342 = vadd.f32 %v341, %v318
        %v343 = vadd.f32 %v342, %v322
        %v344 = vadd.f32 %v343, %v326
        %v345 = vrot.slane %v344, 4
        %v346 = vadd.f32 %v344, %v345
        %v347 = vrot.slane %v346, 2
        %v348 = vadd.f32 %v346, %v347
        %v349 = vrot.slane %v348, 1
        %v350 = vadd.f32 %v348, %v349
        %v351 = vadd.f32 %v267, %v271
        %v352 = vadd.f32 %v351, %v275
        %v353 = vadd.f32 %v352, %v279
        %v354 = vadd.f32 %v353, %v283
        %v355 = vadd.f32 %v354, %v287
        %v356 = vadd.f32 %v355, %v291
        %v357 = vadd.f32 %v356, %v295
        %v358 = vadd.f32 %v357, %v299
        %v359 = vadd.f32 %v358, %v303
        %v360 = vadd.f32 %v359, %v307
        %v361 = vadd.f32 %v360, %v311
        %v362 = vadd.f32 %v361, %v315
        %v363 = vadd.f32 %v362, %v319
        %v364 = vadd.f32 %v363, %v323
        %v365 = vadd.f32 %v364, %v327
        %v366 = vrot.slane %v365, 4
        %v367 = vadd.f32 %v365, %v366
        %v368 = vrot.slane %v367, 2
        %v369 = vadd.f32 %v367, %v368
        %v370 = vrot.slane %v369, 1
        %v371 = vadd.f32 %v369, %v370
        %v372 = vadd.f32 %v268, %v272
        %v373 = vadd.f32 %v372, %v276
        %v374 = vadd.f32 %v373, %v280
        %v375 = vadd.f32 %v374, %v284
        %v376 = vadd.f32 %v375, %v288
        %v377 = vadd.f32 %v376, %v292
        %v378 = vadd.f32 %v377, %v296
        %v379 = vadd.f32 %v378, %v300
        %v380 = vadd.f32 %v379, %v304
        %v381 = vadd.f32 %v380, %v308
        %v382 = vadd.f32 %v381, %v312
        %v383 = vadd.f32 %v382, %v316
        %v384 = vadd.f32 %v383, %v320
        %v385 = vadd.f32 %v384, %v324
        %v386 = vadd.f32 %v385, %v328
        %v387 = vrot.slane %v386, 4
        %v388 = vadd.f32 %v386, %v387
        %v389 = vrot.slane %v388, 2
        %v390 = vadd.f32 %v388, %v389
        %v391 = vrot.slane %v390, 1
        %v392 = vadd.f32 %v390, %v391
        %v393 = vadd.f32 %v269, %v273
        %v394 = vadd.f32 %v393, %v277
        %v395 = vadd.f32 %v394, %v281
        %v396 = vadd.f32 %v395, %v285
        %v397 = vadd.f32 %v396, %v289
        %v398 = vadd.f32 %v397, %v293
        %v399 = vadd.f32 %v398, %v297
        %v400 = vadd.f32 %v399, %v301
        %v401 = vadd.f32 %v400, %v305
        %v402 = vadd.f32 %v401, %v309
        %v403 = vadd.f32 %v402, %v313
        %v404 = vadd.f32 %v403, %v317
        %v405 = vadd.f32 %v404, %v321
        %v406 = vadd.f32 %v405, %v325
        %v407 = vadd.f32 %v406, %v329
        %v408 = vrot.slane %v407, 4
        %v409 = vadd.f32 %v407, %v408
        %v410 = vrot.slane %v409, 2
        %v411 = vadd.f32 %v409, %v410
        %v412 = vrot.slane %v411, 1
        %v413 = vadd.f32 %v411, %v412
        %v418 = vrot.slane %v371, 7
        %v419 = vrot.slane %v392, 6
        %v420 = vrot.slane %v413, 5
        %vm421 = vcmask 1040384
        %v422 = vsel %vm421, %v350, %v418
        %vm423 = vcmask 1042434
        %v424 = vsel %vm423, %v419, %v420
        %vm425 = vcmask 1041408
        %v426 = vsel %vm425, %v422, %v424
        %v428 = vadd.f32 %v233, %v426
        %v429 = vlaneseq
        %vm430 = vcmp.ge.s32.totalorder %v429, 0
        %vm431 = vcmp.lt.s32.totalorder %v429, 512
        %vm432 = vmand %vm430, %vm431
        %433 = vst.msk [vmem:[#allocation2] sm:$0xf] %vm432, %v428
        %p434 = scmp.eq.s32.totalorder %s23, 1
        // Predicated region
        $region45: #{tpu_custom_call.1} parent=31 // pred_check
          %p435 = pneg %p434
        $region46: #{tpu_custom_call.1} parent=31 // pred_check_branch
          %437 = sbr.rel (%p435) target = $region48
        $region47: #{tpu_custom_call.1} parent=31 // pred_region
          %v438 = vld [vmem:[#allocation2] sm:$0xf]
          %v439 = vmul.f32 %v438, 0.00390625
          %v441 = vperm.slane %v439, 0
          %v442 = vperm.slane %v439, 1
          %v443 = vperm.slane %v439, 2
          %v444 = vperm.slane %v439, 3
          %v449 = vpack.c.bf16 %v441, %v441
          %v450 = vpack.c.bf16 %v442, %v442
          %v451 = vpack.c.bf16 %v443, %v443
          %v452 = vpack.c.bf16 %v444, %v444
          %v453 = vld [vmem:[#allocation5] sm:$0xf]
          %v454 = vld [vmem:[#allocation5 + $0x4] sm:$0xf]
          %v455 = vld [vmem:[#allocation5 + $0x8] sm:$0xf]
          %v456 = vld [vmem:[#allocation5 + $0xc] sm:$0xf]
          %v457 = vld [vmem:[#allocation5 + $0x10] sm:$0xf]
          %v458 = vld [vmem:[#allocation5 + $0x14] sm:$0xf]
          %v459 = vld [vmem:[#allocation5 + $0x18] sm:$0xf]
          %v460 = vld [vmem:[#allocation5 + $0x1c] sm:$0xf]
          %v461 = vld [vmem:[#allocation5 + $0x20] sm:$0xf]
          %v462 = vld [vmem:[#allocation5 + $0x24] sm:$0xf]
          %v463 = vld [vmem:[#allocation5 + $0x28] sm:$0xf]
          %v464 = vld [vmem:[#allocation5 + $0x2c] sm:$0xf]
          %v465 = vld [vmem:[#allocation5 + $0x30] sm:$0xf]
          %v466 = vld [vmem:[#allocation5 + $0x34] sm:$0xf]
          %v467 = vld [vmem:[#allocation5 + $0x38] sm:$0xf]
          %v468 = vld [vmem:[#allocation5 + $0x3c] sm:$0xf]
          %v469 = vld [vmem:[#allocation5 + $0x40] sm:$0xf]
          %v470 = vld [vmem:[#allocation5 + $0x44] sm:$0xf]
          %v471 = vld [vmem:[#allocation5 + $0x48] sm:$0xf]
          %v472 = vld [vmem:[#allocation5 + $0x4c] sm:$0xf]
          %v473 = vld [vmem:[#allocation5 + $0x50] sm:$0xf]
          %v474 = vld [vmem:[#allocation5 + $0x54] sm:$0xf]
          %v475 = vld [vmem:[#allocation5 + $0x58] sm:$0xf]
          %v476 = vld [vmem:[#allocation5 + $0x5c] sm:$0xf]
          %v477 = vld [vmem:[#allocation5 + $0x60] sm:$0xf]
          %v478 = vld [vmem:[#allocation5 + $0x64] sm:$0xf]
          %v479 = vld [vmem:[#allocation5 + $0x68] sm:$0xf]
          %v480 = vld [vmem:[#allocation5 + $0x6c] sm:$0xf]
          %v481 = vld [vmem:[#allocation5 + $0x70] sm:$0xf]
          %v482 = vld [vmem:[#allocation5 + $0x74] sm:$0xf]
          %v483 = vld [vmem:[#allocation5 + $0x78] sm:$0xf]
          %v484 = vld [vmem:[#allocation5 + $0x7c] sm:$0xf]
          %v485 = vld [vmem:[#allocation5 + $0x80] sm:$0xf]
          %v486 = vld [vmem:[#allocation5 + $0x84] sm:$0xf]
          %v487 = vld [vmem:[#allocation5 + $0x88] sm:$0xf]
          %v488 = vld [vmem:[#allocation5 + $0x8c] sm:$0xf]
          %v489 = vld [vmem:[#allocation5 + $0x90] sm:$0xf]
          %v490 = vld [vmem:[#allocation5 + $0x94] sm:$0xf]
          %v491 = vld [vmem:[#allocation5 + $0x98] sm:$0xf]
          %v492 = vld [vmem:[#allocation5 + $0x9c] sm:$0xf]
          %v493 = vld [vmem:[#allocation5 + $0xa0] sm:$0xf]
          %v494 = vld [vmem:[#allocation5 + $0xa4] sm:$0xf]
          %v495 = vld [vmem:[#allocation5 + $0xa8] sm:$0xf]
          %v496 = vld [vmem:[#allocation5 + $0xac] sm:$0xf]
          %v497 = vld [vmem:[#allocation5 + $0xb0] sm:$0xf]
          %v498 = vld [vmem:[#allocation5 + $0xb4] sm:$0xf]
          %v499 = vld [vmem:[#allocation5 + $0xb8] sm:$0xf]
          %v500 = vld [vmem:[#allocation5 + $0xbc] sm:$0xf]
          %v501 = vld [vmem:[#allocation5 + $0xc0] sm:$0xf]
          %v502 = vld [vmem:[#allocation5 + $0xc4] sm:$0xf]
          %v503 = vld [vmem:[#allocation5 + $0xc8] sm:$0xf]
          %v504 = vld [vmem:[#allocation5 + $0xcc] sm:$0xf]
          %v505 = vld [vmem:[#allocation5 + $0xd0] sm:$0xf]
          %v506 = vld [vmem:[#allocation5 + $0xd4] sm:$0xf]
          %v507 = vld [vmem:[#allocation5 + $0xd8] sm:$0xf]
          %v508 = vld [vmem:[#allocation5 + $0xdc] sm:$0xf]
          %v509 = vld [vmem:[#allocation5 + $0xe0] sm:$0xf]
          %v510 = vld [vmem:[#allocation5 + $0xe4] sm:$0xf]
          %v511 = vld [vmem:[#allocation5 + $0xe8] sm:$0xf]
          %v512 = vld [vmem:[#allocation5 + $0xec] sm:$0xf]
          %v513 = vld [vmem:[#allocation5 + $0xf0] sm:$0xf]
          %v514 = vld [vmem:[#allocation5 + $0xf4] sm:$0xf]
          %v515 = vld [vmem:[#allocation5 + $0xf8] sm:$0xf]
          %v516 = vld [vmem:[#allocation5 + $0xfc] sm:$0xf]
          %v517 = vld [vmem:[%s2] sm:$0x1]
          %v582 = vunpack.c.l.b16 %v453
          %v583 = vunpack.c.l.b16 %v454
          %v584 = vunpack.c.l.b16 %v455
          %v585 = vunpack.c.l.b16 %v456
          %v586 = vunpack.c.l.b16 %v457
          %v587 = vunpack.c.l.b16 %v458
          %v588 = vunpack.c.l.b16 %v459
          %v589 = vunpack.c.l.b16 %v460
          %v590 = vunpack.c.l.b16 %v461
          %v591 = vunpack.c.l.b16 %v462
          %v592 = vunpack.c.l.b16 %v463
          %v593 = vunpack.c.l.b16 %v464
          %v594 = vunpack.c.l.b16 %v465
          %v595 = vunpack.c.l.b16 %v466
          %v596 = vunpack.c.l.b16 %v467
          %v597 = vunpack.c.l.b16 %v468
          %v598 = vunpack.c.l.b16 %v469
          %v599 = vunpack.c.l.b16 %v470
          %v600 = vunpack.c.l.b16 %v471
          %v601 = vunpack.c.l.b16 %v472
          %v602 = vunpack.c.l.b16 %v473
          %v603 = vunpack.c.l.b16 %v474
          %v604 = vunpack.c.l.b16 %v475
          %v605 = vunpack.c.l.b16 %v476
          %v606 = vunpack.c.l.b16 %v477
          %v607 = vunpack.c.l.b16 %v478
          %v608 = vunpack.c.l.b16 %v479
          %v609 = vunpack.c.l.b16 %v480
          %v610 = vunpack.c.l.b16 %v481
          %v611 = vunpack.c.l.b16 %v482
          %v612 = vunpack.c.l.b16 %v483
          %v613 = vunpack.c.l.b16 %v484
          %v614 = vunpack.c.l.b16 %v485
          %v615 = vunpack.c.l.b16 %v486
          %v616 = vunpack.c.l.b16 %v487
          %v617 = vunpack.c.l.b16 %v488
          %v618 = vunpack.c.l.b16 %v489
          %v619 = vunpack.c.l.b16 %v490
          %v620 = vunpack.c.l.b16 %v491
          %v621 = vunpack.c.l.b16 %v492
          %v622 = vunpack.c.l.b16 %v493
          %v623 = vunpack.c.l.b16 %v494
          %v624 = vunpack.c.l.b16 %v495
          %v625 = vunpack.c.l.b16 %v496
          %v626 = vunpack.c.l.b16 %v497
          %v627 = vunpack.c.l.b16 %v498
          %v628 = vunpack.c.l.b16 %v499
          %v629 = vunpack.c.l.b16 %v500
          %v630 = vunpack.c.l.b16 %v501
          %v631 = vunpack.c.l.b16 %v502
          %v632 = vunpack.c.l.b16 %v503
          %v633 = vunpack.c.l.b16 %v504
          %v634 = vunpack.c.l.b16 %v505
          %v635 = vunpack.c.l.b16 %v506
          %v636 = vunpack.c.l.b16 %v507
          %v637 = vunpack.c.l.b16 %v508
          %v638 = vunpack.c.l.b16 %v509
          %v639 = vunpack.c.l.b16 %v510
          %v640 = vunpack.c.l.b16 %v511
          %v641 = vunpack.c.l.b16 %v512
          %v642 = vunpack.c.l.b16 %v513
          %v643 = vunpack.c.l.b16 %v514
          %v644 = vunpack.c.l.b16 %v515
          %v645 = vunpack.c.l.b16 %v516
          %v646 = vpack.c.b16 %v583, %v582
          %v647 = vpack.c.b16 %v585, %v584
          %v648 = vpack.c.b16 %v587, %v586
          %v649 = vpack.c.b16 %v589, %v588
          %v650 = vpack.c.b16 %v591, %v590
          %v651 = vpack.c.b16 %v593, %v592
          %v652 = vpack.c.b16 %v595, %v594
          %v653 = vpack.c.b16 %v597, %v596
          %v654 = vpack.c.b16 %v599, %v598
          %v655 = vpack.c.b16 %v601, %v600
          %v656 = vpack.c.b16 %v603, %v602
          %v657 = vpack.c.b16 %v605, %v604
          %v658 = vpack.c.b16 %v607, %v606
          %v659 = vpack.c.b16 %v609, %v608
          %v660 = vpack.c.b16 %v611, %v610
          %v661 = vpack.c.b16 %v613, %v612
          %v662 = vpack.c.b16 %v615, %v614
          %v663 = vpack.c.b16 %v617, %v616
          %v664 = vpack.c.b16 %v619, %v618
          %v665 = vpack.c.b16 %v621, %v620
          %v666 = vpack.c.b16 %v623, %v622
          %v667 = vpack.c.b16 %v625, %v624
          %v668 = vpack.c.b16 %v627, %v626
          %v669 = vpack.c.b16 %v629, %v628
          %v670 = vpack.c.b16 %v631, %v630
          %v671 = vpack.c.b16 %v633, %v632
          %v672 = vpack.c.b16 %v635, %v634
          %v673 = vpack.c.b16 %v637, %v636
          %v674 = vpack.c.b16 %v639, %v638
          %v675 = vpack.c.b16 %v641, %v640
          %v676 = vpack.c.b16 %v643, %v642
          %v677 = vpack.c.b16 %v645, %v644
          %710 = vmatpush.bf16.msra.mxu0 %v653
          %711 = vmatpush.bf16.msra.mxu0 %v652
          %712 = vmatpush.bf16.msra.mxu0 %v651
          %713 = vmatpush.bf16.msra.mxu0 %v650
          %714 = vmatpush.bf16.msra.mxu0 %v649
          %715 = vmatpush.bf16.msra.mxu0 %v648
          %716 = vmatpush.bf16.msra.mxu0 %v647
          %717 = vmatpush.bf16.msra.mxu0 %v646
          %718 = vmatmul.bf16.gmra.mxu0 %v449
          %v719 = vpop.f32.mrf.mxu0
          %v720 = vadd.f32 %v517, %v719
          %v721 = vpop.f32.mrf.mxu0
          %722 = vdwg.mxu0
          %723 = vmatpush.bf16.msra.mxu0 %v661
          %724 = vmatpush.bf16.msra.mxu0 %v660
          %725 = vmatpush.bf16.msra.mxu0 %v659
          %726 = vmatpush.bf16.msra.mxu0 %v658
          %727 = vmatpush.bf16.msra.mxu0 %v657
          %728 = vmatpush.bf16.msra.mxu0 %v656
          %729 = vmatpush.bf16.msra.mxu0 %v655
          %730 = vmatpush.bf16.msra.mxu0 %v654
          %731 = vmatmul.bf16.gmra.mxu0 %v450
          %v732 = vpop.f32.mrf.mxu0
          %v733 = vadd.f32 %v720, %v732
          %v734 = vpop.f32.mrf.mxu0
          %735 = vdwg.mxu0
          %736 = vmatpush.bf16.msra.mxu0 %v669
          %737 = vmatpush.bf16.msra.mxu0 %v668
          %738 = vmatpush.bf16.msra.mxu0 %v667
          %739 = vmatpush.bf16.msra.mxu0 %v666
          %740 = vmatpush.bf16.msra.mxu0 %v665
          %741 = vmatpush.bf16.msra.mxu0 %v664
          %742 = vmatpush.bf16.msra.mxu0 %v663
          %743 = vmatpush.bf16.msra.mxu0 %v662
          %744 = vmatmul.bf16.gmra.mxu0 %v451
          %v745 = vpop.f32.mrf.mxu0
          %v746 = vadd.f32 %v733, %v745
          %v747 = vpop.f32.mrf.mxu0
          %748 = vdwg.mxu0
          %749 = vmatpush.bf16.msra.mxu0 %v677
          %750 = vmatpush.bf16.msra.mxu0 %v676
          %751 = vmatpush.bf16.msra.mxu0 %v675
          %752 = vmatpush.bf16.msra.mxu0 %v674
          %753 = vmatpush.bf16.msra.mxu0 %v673
          %754 = vmatpush.bf16.msra.mxu0 %v672
          %755 = vmatpush.bf16.msra.mxu0 %v671
          %756 = vmatpush.bf16.msra.mxu0 %v670
          %757 = vmatmul.bf16.gmra.mxu0 %v452
          %v758 = vpop.f32.mrf.mxu0
          %v759 = vadd.f32 %v746, %v758
          %v760 = vpop.f32.mrf.mxu0
          %761 = vdwg.mxu0
          %v762 = vmax.f32 %v759, 0.0
          %v763 = vpack.c.bf16 %v762, %v762
          %vm764 = vcmask 1040384
          %vm765 = vsmask.f32 256
          %vm766 = vmand %vm764, %vm765
          %v767 = vld [vmem:[%s223] sm:$0x1]
          %v768 = vsel %vm766, %v763, %v767
          %769 = vst [vmem:[%s223] sm:$0x1] %v768
        $region48: #{tpu_custom_call.1} parent=31 // pred_fallthru
          _
        %p770 = scmp.lt.s32.totalorder %s22, 1
        %s771 = scalar_select %p770, %s22, 1
        %s772 = scalar_lea.vmem %s3, %s771
        // Predicated region
        $region49: #{tpu_custom_call.1} parent=31 // pred_check
          %p773 = pneg %p118
        $region50: #{tpu_custom_call.1} parent=31 // pred_check_branch
          %775 = sbr.rel (%p773) target = $region52
        $region51: #{tpu_custom_call.1} parent=31 // pred_region
          _
        $region52: #{tpu_custom_call.1} parent=31 // pred_fallthru
          _
      $region32: #{tpu_custom_call.1} parent=5 // pred_fallthru
        _
      %p776 = scmp.le.s32.totalorder 2, %s13
      // Predicated region
      $region53: #{tpu_custom_call.1} parent=5 // pred_check
        %p777 = pneg %p776
      $region54: #{tpu_custom_call.1} parent=5 // pred_check_branch
        %779 = sbr.rel (%p777) target = $region56
      $region55: #{tpu_custom_call.1} parent=5 // pred_region
        %s780 = ssub.s32 %s13, 2
        // Predicated region
        $region57: #{tpu_custom_call.1} parent=55 // pred_check
          %p781 = pneg %p124
        $region58: #{tpu_custom_call.1} parent=55 // pred_check_branch
          %783 = sbr.rel (%p781) target = $region60
        $region59: #{tpu_custom_call.1} parent=55 // pred_region
          %p784 = scmp.lt.s32.totalorder %s24, 1
          %s785 = scalar_select %p784, %s24, 1
          %s786 = scalar_lea.vmem %s3, %s785
        $region60: #{tpu_custom_call.1} parent=55 // pred_fallthru
          _
      $region56: #{tpu_custom_call.1} parent=5 // pred_fallthru
        _
    $region6: #{tpu_custom_call.1} parent=1 // loop_footer
      %s17 = sadd.s32 1, %s13
    $region7: #{tpu_custom_call.1} parent=1 // loop_footer_branch
      %12 = sbr.rel target = $region3
    $region8: #{tpu_custom_call.1} parent=1 // loop_exit
      _
    %787 = vsyncpa [#allocation4], 1
    %s788 = scalar_lea.sflag [#allocation4], 1
    %789 = vsyncpa %s788, 1
    %790 = vsyncpa [#allocation6], 1

</llo_original>
